<compile_context>
chip_gen: v7x
topology: tpu7x:2x2x1
jax: 0.10.0
libtpu: 0.0.40
codegen_flags: <defaults>
</compile_context>

<pallas_src>
import functools

import jax
import jax.numpy as jnp
from jax.experimental import pallas as pl
from jax.experimental.pallas import tpu as pltpu


def _quantize_kernel(x_ref, mid_ref, perm_ref, out_ref, *, num_mid, do_remap):
    # x_ref:    (r, s)   f32  un-permuted activations (rows = B*C fold, padded)
    # mid_ref:  (r, Q-1) f32  per-row midpoints of the *sorted* levels
    # perm_ref: (r, 1)   i32  argsort permutation, bit-packed 4 bits/level (Q<=8)
    # out_ref:  (r, s)   i8 (or i32)  level index (original order if do_remap,
    #                                 otherwise sorted order)
    x = x_ref[...]                                      # (r, s)
    mids = mid_ref[...]                                 # (r, Q-1)
    idx = jnp.zeros(x.shape, dtype=jnp.int32)
    for q in range(num_mid):                            # static unroll, Q tiny
        # strict '>' so an exact-midpoint tie resolves to the lower sorted
        # index, matching torch.min's first-min behavior for sorted levels.
        idx += (x > mids[:, q:q + 1]).astype(jnp.int32)
    if do_remap:
        # sorted index -> original level index via the bit-packed permutation.
        # With Q <= 8 every nibble holds a value <= 7, so bit 31 of `packed`
        # is clear and arithmetic shift == logical shift.  ~3 VPU ops/elem.
        packed = perm_ref[...]                          # (r, 1) int32
        orig = jnp.right_shift(packed, 4 * idx) & 0xF
        out_ref[...] = orig.astype(out_ref.dtype)
    else:
        out_ref[...] = idx.astype(out_ref.dtype)


def _round_up(n, m):
    return ((n + m - 1) // m) * m


def _pick_tile(n, align, cap):
    """Largest multiple of `align` that divides `n` and is <= cap.
    `n` must already be a multiple of `align` (the wrapper pads to ensure it),
    so this never falls back to a full-extent (VMEM-hazard) block."""
    assert n % align == 0 and n >= align
    t = min(cap, n)
    t -= t % align
    while t >= align:
        if n % t == 0:
            return t
        t -= align
    return align  # unreachable: align always divides n


def ccp_quantize(x, curve, levels):
    """Pallas implementation of CCP.forward up to (and including) the
    quantization-to-strings step.

    x:      (B, C, H, W) float32 (NCHW)
    curve:  (L,) int32 indices into H*W (space-filling curve, curves[i])
    levels: (C, Q) float32 quantization levels (levels[i])
    returns strings: (B, C, L) int32
    """
    B, C, H, W = x.shape
    S = H * W
    Q = levels.shape[1]
    R = B * C

    if Q == 1:
        # Degenerate case: only one level -> all indices are 0.
        return jnp.zeros((B, C, curve.shape[0]), dtype=jnp.int32)

    x_rows = x.reshape(R, S).astype(jnp.float32)        # rows on sublanes

    # Sort levels per channel; abs-argmin over sorted levels == midpoint
    # searchsorted.  The argsort permutation maps sorted indices back to the
    # original level order (so unsorted `levels[i]` are handled faithfully).
    order = jnp.argsort(levels, axis=1).astype(jnp.int32)            # (C, Q)
    lv_sorted = jnp.take_along_axis(levels, order, axis=1)           # (C, Q)
    mids_c = 0.5 * (lv_sorted[:, :-1] + lv_sorted[:, 1:])            # (C, Q-1)

    do_remap = Q <= 8     # one int32 holds the whole permutation (4-bit fields)
    if do_remap:
        shifts = 4 * jnp.arange(Q, dtype=jnp.int32)[None, :]         # (1, Q)
        packed_c = jnp.sum(jnp.left_shift(order, shifts), axis=1,
                           keepdims=True).astype(jnp.int32)          # (C, 1)
    else:
        packed_c = jnp.zeros((C, 1), dtype=jnp.int32)                # unused

    mids = jnp.tile(mids_c, (B, 1))                                  # (R, Q-1)
    packed = jnp.tile(packed_c, (B, 1))                              # (R, 1)

    # Pad rows to a multiple of 32 (int8 native sublane tiling) and the
    # spatial axis to a multiple of 128 (lane width): packed unmasked stores
    # and bounded VMEM blocks on v5e / v6e / v7x, no full-extent fallback.
    R_pad = _round_up(R, 32)
    S_pad = _round_up(S, 128)
    if R_pad != R or S_pad != S:
        x_rows = jnp.pad(x_rows, ((0, R_pad - R), (0, S_pad - S)))
    if R_pad != R:
        mids = jnp.pad(mids, ((0, R_pad - R), (0, 0)))
        packed = jnp.pad(packed, ((0, R_pad - R), (0, 0)))

    # int8 output holds any Q <= 127 index; widen only for very large Q.
    out_dtype = jnp.int8 if Q <= 127 else jnp.int32

    # ~4 MiB of input per grid step amortizes the ~0.35 us/step overhead while
    # keeping double-buffered VMEM (2x in f32 + 2x out i8 + mids + perm) at
    # ~10.5 MiB: under v5e's 16 MiB scoped default, v7x's 64 MiB physical.
    r_tile = _pick_tile(R_pad, 32, 256)
    s_tile = _pick_tile(S_pad, 128, 4096)
    # Rows leading (megacore splits along rows on v7x), spatial innermost so
    # the mids / packed-perm blocks (index_map (r, 0)) stay resident across
    # the whole spatial sweep without re-DMA.
    grid = (R_pad // r_tile, S_pad // s_tile)

    kernel = functools.partial(_quantize_kernel, num_mid=Q - 1,
                               do_remap=do_remap)
    q_pad = pl.pallas_call(
        kernel,
        out_shape=jax.ShapeDtypeStruct((R_pad, S_pad), out_dtype),
        grid=grid,
        in_specs=[
            pl.BlockSpec((r_tile, s_tile), lambda r, s: (r, s)),
            pl.BlockSpec((r_tile, Q - 1), lambda r, s: (r, 0)),
            pl.BlockSpec((r_tile, 1), lambda r, s: (r, 0)),
        ],
        out_specs=pl.BlockSpec((r_tile, s_tile), lambda r, s: (r, s)),
        compiler_params=pltpu.CompilerParams(
            dimension_semantics=("parallel", "parallel"),
            vmem_limit_bytes=32 * 1024 * 1024),
    )(x_rows, mids, packed)

    q = q_pad[:R, :S].reshape(B, C, S)                  # still int8 (Q<=127)
    if not do_remap:
        # Q > 8: permutation doesn't fit one int32; remap sorted->original in
        # XLA, staying in the narrow dtype until after the curve gather.
        order_b = jnp.broadcast_to(order.astype(out_dtype)[None], (B, C, Q))
        q = jnp.take_along_axis(order_b, q, axis=2)

    # Space-filling-curve gather on the small integer tensor (quantization is
    # elementwise over space, so it commutes with the permutation); upcast to
    # int32 only on the final (B, C, L) "strings".
    strings = q[:, :, curve].astype(jnp.int32)
    return strings


if __name__ == "__main__":
    key = jax.random.PRNGKey(0)
    B, C, H, W = 2, 4, 16, 16
    Q = 8                      # number of quantization levels
    S = H * W

    k1, k2, k3 = jax.random.split(key, 3)
    x = jax.random.normal(k1, (B, C, H, W), dtype=jnp.float32)
    # curves[i]: a deterministic space-filling-curve style permutation of pixels
    curve = jax.random.permutation(k2, S).astype(jnp.int32)
    # levels[i]: per-channel quantization levels, shape (C, Q).  Left UNSORTED
    # on purpose to exercise the in-kernel bit-packed argsort remap.
    levels = jax.random.normal(k3, (C, Q), dtype=jnp.float32)
    # pmaps[i]: prototype strings for the NCD stage, shape (P0, P1, Lp)
    P0, P1, Lp = 3, 2, 32
    pmaps = (jax.random.uniform(jax.random.PRNGKey(1), (P0, P1, Lp)) * Q).astype(jnp.int32)

    strings = ccp_quantize(x, curve, levels)
    strings = jax.block_until_ready(strings)

    # Pure-JAX reference of the same (view -> curve gather -> abs-min argmin) path.
    L = curve.shape[0]
    xf = x.reshape(B, C, S)[:, :, curve]
    ref = jnp.argmin(
        jnp.abs(xf[:, :, None, :] - levels[None, :, :, None]), axis=2
    ).astype(jnp.int32)
    assert strings.shape == (B, C, L)
    assert bool(jnp.all(strings == ref)), "Pallas output mismatch vs reference"

    # TODO(synk): cutils.get_LZW_NCD (LZW-compression-based NCD on the int32
    # strings vs pmaps, producing ncds of shape (B, P0, P1)) is a sequential,
    # data-dependent dictionary-compression CUDA extension with no clean Pallas
    # equivalent; that stage is intentionally not reproduced here.
    _ = pmaps  # kept to mirror the module's pmaps[i] parameter

    print("KERNEL_OK")
</pallas_src>

<mosaic_0001>
module attributes {stable_mosaic.version = 11 : i64} {
  func.func @_quantize_kernel(%arg0: i32, %arg1: i32, %arg2: memref<32x256xf32, #tpu.memory_space<vmem>>, %arg3: memref<32x7xf32, #tpu.memory_space<vmem>>, %arg4: memref<32x1xi32, #tpu.memory_space<vmem>>, %arg5: memref<32x256xi8, #tpu.memory_space<vmem>>) attributes {dimension_semantics = [#tpu.dimension_semantics<parallel>, #tpu.dimension_semantics<parallel>], iteration_bounds = array<i64: 1, 1>, scalar_prefetch = 0 : i64, scratch_operands = 0 : i64, tpu.core_type = #tpu.core_type<tc>, window_params = [{transform_indices = @transform_0, window_bounds = array<i64: 32, 256>}, {transform_indices = @transform_1, window_bounds = array<i64: 32, 7>}, {transform_indices = @transform_2, window_bounds = array<i64: 32, 1>}, {transform_indices = @transform_3, window_bounds = array<i64: 32, 256>}]} {
    %c0 = arith.constant 0 : index
    %c0_0 = arith.constant 0 : index
    %0 = vector.load %arg2[%c0, %c0_0] : memref<32x256xf32, #tpu.memory_space<vmem>>, vector<32x256xf32>
    %c0_1 = arith.constant 0 : index
    %c0_2 = arith.constant 0 : index
    %1 = vector.load %arg3[%c0_1, %c0_2] : memref<32x7xf32, #tpu.memory_space<vmem>>, vector<32x7xf32>
    %c0_i32 = arith.constant 0 : i32
    %2 = vector.broadcast %c0_i32 : i32 to vector<32x256xi32>
    %3 = vector.extract_strided_slice %1 {offsets = [0, 0], sizes = [32, 1], strides = [1, 1]} : vector<32x7xf32> to vector<32x1xf32>
    %4 = vector.broadcast %3 : vector<32x1xf32> to vector<32x256xf32>
    %5 = arith.cmpf ogt, %0, %4 : vector<32x256xf32>
    %6 = arith.extui %5 : vector<32x256xi1> to vector<32x256xi32>
    %7 = arith.addi %2, %6 : vector<32x256xi32>
    %8 = vector.extract_strided_slice %1 {offsets = [0, 1], sizes = [32, 1], strides = [1, 1]} : vector<32x7xf32> to vector<32x1xf32>
    %9 = vector.broadcast %8 : vector<32x1xf32> to vector<32x256xf32>
    %10 = arith.cmpf ogt, %0, %9 : vector<32x256xf32>
    %11 = arith.extui %10 : vector<32x256xi1> to vector<32x256xi32>
    %12 = arith.addi %7, %11 : vector<32x256xi32>
    %13 = vector.extract_strided_slice %1 {offsets = [0, 2], sizes = [32, 1], strides = [1, 1]} : vector<32x7xf32> to vector<32x1xf32>
    %14 = vector.broadcast %13 : vector<32x1xf32> to vector<32x256xf32>
    %15 = arith.cmpf ogt, %0, %14 : vector<32x256xf32>
    %16 = arith.extui %15 : vector<32x256xi1> to vector<32x256xi32>
    %17 = arith.addi %12, %16 : vector<32x256xi32>
    %18 = vector.extract_strided_slice %1 {offsets = [0, 3], sizes = [32, 1], strides = [1, 1]} : vector<32x7xf32> to vector<32x1xf32>
    %19 = vector.broadcast %18 : vector<32x1xf32> to vector<32x256xf32>
    %20 = arith.cmpf ogt, %0, %19 : vector<32x256xf32>
    %21 = arith.extui %20 : vector<32x256xi1> to vector<32x256xi32>
    %22 = arith.addi %17, %21 : vector<32x256xi32>
    %23 = vector.extract_strided_slice %1 {offsets = [0, 4], sizes = [32, 1], strides = [1, 1]} : vector<32x7xf32> to vector<32x1xf32>
    %24 = vector.broadcast %23 : vector<32x1xf32> to vector<32x256xf32>
    %25 = arith.cmpf ogt, %0, %24 : vector<32x256xf32>
    %26 = arith.extui %25 : vector<32x256xi1> to vector<32x256xi32>
    %27 = arith.addi %22, %26 : vector<32x256xi32>
    %28 = vector.extract_strided_slice %1 {offsets = [0, 5], sizes = [32, 1], strides = [1, 1]} : vector<32x7xf32> to vector<32x1xf32>
    %29 = vector.broadcast %28 : vector<32x1xf32> to vector<32x256xf32>
    %30 = arith.cmpf ogt, %0, %29 : vector<32x256xf32>
    %31 = arith.extui %30 : vector<32x256xi1> to vector<32x256xi32>
    %32 = arith.addi %27, %31 : vector<32x256xi32>
    %33 = vector.extract_strided_slice %1 {offsets = [0, 6], sizes = [32, 1], strides = [1, 1]} : vector<32x7xf32> to vector<32x1xf32>
    %34 = vector.broadcast %33 : vector<32x1xf32> to vector<32x256xf32>
    %35 = arith.cmpf ogt, %0, %34 : vector<32x256xf32>
    %36 = arith.extui %35 : vector<32x256xi1> to vector<32x256xi32>
    %37 = arith.addi %32, %36 : vector<32x256xi32>
    %c0_3 = arith.constant 0 : index
    %c0_4 = arith.constant 0 : index
    %38 = vector.load %arg4[%c0_3, %c0_4] : memref<32x1xi32, #tpu.memory_space<vmem>>, vector<32x1xi32>
    %c4_i32 = arith.constant 4 : i32
    %39 = vector.broadcast %c4_i32 : i32 to vector<32x256xi32>
    %40 = arith.muli %39, %37 : vector<32x256xi32>
    %41 = vector.broadcast %38 : vector<32x1xi32> to vector<32x256xi32>
    %42 = arith.shrsi %41, %40 : vector<32x256xi32>
    %c15_i32 = arith.constant 15 : i32
    %43 = vector.broadcast %c15_i32 : i32 to vector<32x256xi32>
    %44 = arith.andi %42, %43 : vector<32x256xi32>
    %45 = arith.trunci %44 : vector<32x256xi32> to vector<32x256xi8>
    %c0_5 = arith.constant 0 : index
    %c0_6 = arith.constant 0 : index
    %46 = vector.load %arg5[%c0_5, %c0_6] : memref<32x256xi8, #tpu.memory_space<vmem>>, vector<32x256xi8>
    tpu.vector_store %arg5[%c0_5, %c0_6], %45 {strides = array<i32>} : memref<32x256xi8, #tpu.memory_space<vmem>>, vector<32x256xi8>,
    return
  }
  func.func @transform_0(%arg0: i32, %arg1: i32) -> (i32, i32) {
    %c0_i32 = arith.constant 0 : i32
    return %arg0, %arg1 : i32, i32
  }
  func.func @transform_1(%arg0: i32, %arg1: i32) -> (i32, i32) {
    %c0_i32 = arith.constant 0 : i32
    %c0_i32_0 = arith.constant 0 : i32
    return %arg0, %c0_i32 : i32, i32
  }
  func.func @transform_2(%arg0: i32, %arg1: i32) -> (i32, i32) {
    %c0_i32 = arith.constant 0 : i32
    %c0_i32_0 = arith.constant 0 : i32
    return %arg0, %c0_i32 : i32, i32
  }
  func.func @transform_3(%arg0: i32, %arg1: i32) -> (i32, i32) {
    %c0_i32 = arith.constant 0 : i32
    return %arg0, %arg1 : i32, i32
  }
}

</mosaic_0001>

<llo_original>
// kernel: tpu_custom_call.1
$region0: #{tpu_custom_call.1}
  #allocation0 [shape = 'u32[]', space=smem, size = 0x4, offset = 0x4, fixed_abs, tag = 'smem constant byte address 0x4 - core index']
  #allocation1 [shape = 'u32[144,128]{1,0:T(1,128)}', space=vmem, size = 0x12000, scoped, tag = 'internal scratch']
  %s0 = inlined_call_operand.vmem [shape: f32[32,256], index: 0, kind: input, shape index: {}]
  %s1 = inlined_call_operand.vmem [shape: f32[32,7], index: 1, kind: input, shape index: {}]
  %s2 = inlined_call_operand.vmem [shape: s32[32,1], index: 2, kind: input, shape index: {}]
  %s3 = inlined_call_operand.hbm [shape: s8[32,256], index: 3, kind: output, shape index: {}]
  %s4 = sld [smem:[#allocation0]]
  $region22: #{tpu_custom_call.1} parent=0
    _
  %s6 = ssub.s32 1, %s4
  %s7 = scalar_select 0, %s6, %s4
  $region1: #{tpu_custom_call.1} parent=0
    #allocation2 [shape = 'u8[8192]{0}', space=vmem, size = 0x2000, scoped, tag = 'output window, operand 0, single buffered']
    #allocation3 [shape = 's32[1]{0}', space=sflag, size = 0x4, scoped, tag = 'scoped memory for tpu_custom_call.1']
    %8 = vsyncpa [#allocation3], 0
    // Predicated region
    $region2: #{tpu_custom_call.1} parent=1 // pred_check
      _
    $region3: #{tpu_custom_call.1} parent=1 // pred_check_branch
      %10 = sbr.rel (0) target = $region5
    $region4: #{tpu_custom_call.1} parent=1 // pred_region
      _
    $region5: #{tpu_custom_call.1} parent=1 // pred_fallthru
      _
    // Predicated region
    $region6: #{tpu_custom_call.1} parent=1 // pred_check
      _
    $region7: #{tpu_custom_call.1} parent=1 // pred_check_branch
      %12 = sbr.rel (0) target = $region9
    $region8: #{tpu_custom_call.1} parent=1 // pred_region
      _
    $region9: #{tpu_custom_call.1} parent=1 // pred_fallthru
      _
    // Predicated region
    $region10: #{tpu_custom_call.1} parent=1 // pred_check
      _
    $region11: #{tpu_custom_call.1} parent=1 // pred_check_branch
      %14 = sbr.rel (0) target = $region13
    $region12: #{tpu_custom_call.1} parent=1 // pred_region
      _
    $region13: #{tpu_custom_call.1} parent=1 // pred_fallthru
      _
    %v15 = vld [vmem:[%s0] sm:$0xff]
    %v16 = vld [vmem:[%s0 + $0x8] sm:$0xff]
    %v17 = vld [vmem:[%s0 + $0x10] sm:$0xff]
    %v18 = vld [vmem:[%s0 + $0x18] sm:$0xff]
    %v19 = vld [vmem:[%s0 + $0x20] sm:$0xff]
    %v20 = vld [vmem:[%s0 + $0x28] sm:$0xff]
    %v21 = vld [vmem:[%s0 + $0x30] sm:$0xff]
    %v22 = vld [vmem:[%s0 + $0x38] sm:$0xff]
    %v23 = vld [vmem:[%s1] sm:$0xff]
    %v24 = vld [vmem:[%s1 + $0x8] sm:$0xff]
    %v25 = vld [vmem:[%s1 + $0x10] sm:$0xff]
    %v26 = vld [vmem:[%s1 + $0x18] sm:$0xff]
    %28 = vset.pattern.permute.xlu0 0
    %29 = vperm.xlu0 %28, %v23
    %v30 = vpop.permute.xlu0 %29
    %33 = vset.pattern.permute.xlu0 0
    %34 = vperm.xlu0 %33, %v24
    %v35 = vpop.permute.xlu0 %34
    %38 = vset.pattern.permute.xlu0 0
    %39 = vperm.xlu0 %38, %v25
    %v40 = vpop.permute.xlu0 %39
    %43 = vset.pattern.permute.xlu0 0
    %44 = vperm.xlu0 %43, %v26
    %v45 = vpop.permute.xlu0 %44
    %vm47 = vcmp.gt.f32.partialorder %v15, %v30
    %vm48 = vcmp.gt.f32.partialorder %v16, %v30
    %vm49 = vcmp.gt.f32.partialorder %v17, %v35
    %vm50 = vcmp.gt.f32.partialorder %v18, %v35
    %vm51 = vcmp.gt.f32.partialorder %v19, %v40
    %vm52 = vcmp.gt.f32.partialorder %v20, %v40
    %vm53 = vcmp.gt.f32.partialorder %v21, %v45
    %vm54 = vcmp.gt.f32.partialorder %v22, %v45
    %v55 = vsel %vm47, 1, 0
    %v56 = vsel %vm48, 1, 0
    %v57 = vsel %vm49, 1, 0
    %v58 = vsel %vm50, 1, 0
    %v59 = vsel %vm51, 1, 0
    %v60 = vsel %vm52, 1, 0
    %v61 = vsel %vm53, 1, 0
    %v62 = vsel %vm54, 1, 0
    %63 = vset.pattern.permute.xlu0 1
    %64 = vperm.xlu0 %63, %v23
    %v65 = vpop.permute.xlu0 %64
    %67 = vset.pattern.permute.xlu0 1
    %68 = vperm.xlu0 %67, %v24
    %v69 = vpop.permute.xlu0 %68
    %71 = vset.pattern.permute.xlu0 1
    %72 = vperm.xlu0 %71, %v25
    %v73 = vpop.permute.xlu0 %72
    %75 = vset.pattern.permute.xlu0 1
    %76 = vperm.xlu0 %75, %v26
    %v77 = vpop.permute.xlu0 %76
    %vm79 = vcmp.gt.f32.partialorder %v15, %v65
    %vm80 = vcmp.gt.f32.partialorder %v16, %v65
    %vm81 = vcmp.gt.f32.partialorder %v17, %v69
    %vm82 = vcmp.gt.f32.partialorder %v18, %v69
    %vm83 = vcmp.gt.f32.partialorder %v19, %v73
    %vm84 = vcmp.gt.f32.partialorder %v20, %v73
    %vm85 = vcmp.gt.f32.partialorder %v21, %v77
    %vm86 = vcmp.gt.f32.partialorder %v22, %v77
    %v87 = vsel %vm79, 1, 0
    %v88 = vsel %vm80, 1, 0
    %v89 = vsel %vm81, 1, 0
    %v90 = vsel %vm82, 1, 0
    %v91 = vsel %vm83, 1, 0
    %v92 = vsel %vm84, 1, 0
    %v93 = vsel %vm85, 1, 0
    %v94 = vsel %vm86, 1, 0
    %v95 = vadd.s32 %v55, %v87
    %v96 = vadd.s32 %v56, %v88
    %v97 = vadd.s32 %v57, %v89
    %v98 = vadd.s32 %v58, %v90
    %v99 = vadd.s32 %v59, %v91
    %v100 = vadd.s32 %v60, %v92
    %v101 = vadd.s32 %v61, %v93
    %v102 = vadd.s32 %v62, %v94
    %103 = vset.pattern.permute.xlu0 2
    %104 = vperm.xlu0 %103, %v23
    %v105 = vpop.permute.xlu0 %104
    %107 = vset.pattern.permute.xlu0 2
    %108 = vperm.xlu0 %107, %v24
    %v109 = vpop.permute.xlu0 %108
    %111 = vset.pattern.permute.xlu0 2
    %112 = vperm.xlu0 %111, %v25
    %v113 = vpop.permute.xlu0 %112
    %115 = vset.pattern.permute.xlu0 2
    %116 = vperm.xlu0 %115, %v26
    %v117 = vpop.permute.xlu0 %116
    %vm119 = vcmp.gt.f32.partialorder %v15, %v105
    %vm120 = vcmp.gt.f32.partialorder %v16, %v105
    %vm121 = vcmp.gt.f32.partialorder %v17, %v109
    %vm122 = vcmp.gt.f32.partialorder %v18, %v109
    %vm123 = vcmp.gt.f32.partialorder %v19, %v113
    %vm124 = vcmp.gt.f32.partialorder %v20, %v113
    %vm125 = vcmp.gt.f32.partialorder %v21, %v117
    %vm126 = vcmp.gt.f32.partialorder %v22, %v117
    %v127 = vsel %vm119, 1, 0
    %v128 = vsel %vm120, 1, 0
    %v129 = vsel %vm121, 1, 0
    %v130 = vsel %vm122, 1, 0
    %v131 = vsel %vm123, 1, 0
    %v132 = vsel %vm124, 1, 0
    %v133 = vsel %vm125, 1, 0
    %v134 = vsel %vm126, 1, 0
    %v135 = vadd.s32 %v95, %v127
    %v136 = vadd.s32 %v96, %v128
    %v137 = vadd.s32 %v97, %v129
    %v138 = vadd.s32 %v98, %v130
    %v139 = vadd.s32 %v99, %v131
    %v140 = vadd.s32 %v100, %v132
    %v141 = vadd.s32 %v101, %v133
    %v142 = vadd.s32 %v102, %v134
    %143 = vset.pattern.permute.xlu0 3
    %144 = vperm.xlu0 %143, %v23
    %v145 = vpop.permute.xlu0 %144
    %147 = vset.pattern.permute.xlu0 3
    %148 = vperm.xlu0 %147, %v24
    %v149 = vpop.permute.xlu0 %148
    %151 = vset.pattern.permute.xlu0 3
    %152 = vperm.xlu0 %151, %v25
    %v153 = vpop.permute.xlu0 %152
    %155 = vset.pattern.permute.xlu0 3
    %156 = vperm.xlu0 %155, %v26
    %v157 = vpop.permute.xlu0 %156
    %vm159 = vcmp.gt.f32.partialorder %v15, %v145
    %vm160 = vcmp.gt.f32.partialorder %v16, %v145
    %vm161 = vcmp.gt.f32.partialorder %v17, %v149
    %vm162 = vcmp.gt.f32.partialorder %v18, %v149
    %vm163 = vcmp.gt.f32.partialorder %v19, %v153
    %vm164 = vcmp.gt.f32.partialorder %v20, %v153
    %vm165 = vcmp.gt.f32.partialorder %v21, %v157
    %vm166 = vcmp.gt.f32.partialorder %v22, %v157
    %v167 = vsel %vm159, 1, 0
    %v168 = vsel %vm160, 1, 0
    %v169 = vsel %vm161, 1, 0
    %v170 = vsel %vm162, 1, 0
    %v171 = vsel %vm163, 1, 0
    %v172 = vsel %vm164, 1, 0
    %v173 = vsel %vm165, 1, 0
    %v174 = vsel %vm166, 1, 0
    %v175 = vadd.s32 %v135, %v167
    %v176 = vadd.s32 %v136, %v168
    %v177 = vadd.s32 %v137, %v169
    %v178 = vadd.s32 %v138, %v170
    %v179 = vadd.s32 %v139, %v171
    %v180 = vadd.s32 %v140, %v172
    %v181 = vadd.s32 %v141, %v173
    %v182 = vadd.s32 %v142, %v174
    %183 = vset.pattern.permute.xlu0 4
    %184 = vperm.xlu0 %183, %v23
    %v185 = vpop.permute.xlu0 %184
    %187 = vset.pattern.permute.xlu0 4
    %188 = vperm.xlu0 %187, %v24
    %v189 = vpop.permute.xlu0 %188
    %191 = vset.pattern.permute.xlu0 4
    %192 = vperm.xlu0 %191, %v25
    %v193 = vpop.permute.xlu0 %192
    %195 = vset.pattern.permute.xlu0 4
    %196 = vperm.xlu0 %195, %v26
    %v197 = vpop.permute.xlu0 %196
    %vm199 = vcmp.gt.f32.partialorder %v15, %v185
    %vm200 = vcmp.gt.f32.partialorder %v16, %v185
    %vm201 = vcmp.gt.f32.partialorder %v17, %v189
    %vm202 = vcmp.gt.f32.partialorder %v18, %v189
    %vm203 = vcmp.gt.f32.partialorder %v19, %v193
    %vm204 = vcmp.gt.f32.partialorder %v20, %v193
    %vm205 = vcmp.gt.f32.partialorder %v21, %v197
    %vm206 = vcmp.gt.f32.partialorder %v22, %v197
    %v207 = vsel %vm199, 1, 0
    %v208 = vsel %vm200, 1, 0
    %v209 = vsel %vm201, 1, 0
    %v210 = vsel %vm202, 1, 0
    %v211 = vsel %vm203, 1, 0
    %v212 = vsel %vm204, 1, 0
    %v213 = vsel %vm205, 1, 0
    %v214 = vsel %vm206, 1, 0
    %v215 = vadd.s32 %v175, %v207
    %v216 = vadd.s32 %v176, %v208
    %v217 = vadd.s32 %v177, %v209
    %v218 = vadd.s32 %v178, %v210
    %v219 = vadd.s32 %v179, %v211
    %v220 = vadd.s32 %v180, %v212
    %v221 = vadd.s32 %v181, %v213
    %v222 = vadd.s32 %v182, %v214
    %223 = vset.pattern.permute.xlu0 5
    %224 = vperm.xlu0 %223, %v23
    %v225 = vpop.permute.xlu0 %224
    %227 = vset.pattern.permute.xlu0 5
    %228 = vperm.xlu0 %227, %v24
    %v229 = vpop.permute.xlu0 %228
    %231 = vset.pattern.permute.xlu0 5
    %232 = vperm.xlu0 %231, %v25
    %v233 = vpop.permute.xlu0 %232
    %235 = vset.pattern.permute.xlu0 5
    %236 = vperm.xlu0 %235, %v26
    %v237 = vpop.permute.xlu0 %236
    %vm239 = vcmp.gt.f32.partialorder %v15, %v225
    %vm240 = vcmp.gt.f32.partialorder %v16, %v225
    %vm241 = vcmp.gt.f32.partialorder %v17, %v229
    %vm242 = vcmp.gt.f32.partialorder %v18, %v229
    %vm243 = vcmp.gt.f32.partialorder %v19, %v233
    %vm244 = vcmp.gt.f32.partialorder %v20, %v233
    %vm245 = vcmp.gt.f32.partialorder %v21, %v237
    %vm246 = vcmp.gt.f32.partialorder %v22, %v237
    %v247 = vsel %vm239, 1, 0
    %v248 = vsel %vm240, 1, 0
    %v249 = vsel %vm241, 1, 0
    %v250 = vsel %vm242, 1, 0
    %v251 = vsel %vm243, 1, 0
    %v252 = vsel %vm244, 1, 0
    %v253 = vsel %vm245, 1, 0
    %v254 = vsel %vm246, 1, 0
    %v255 = vadd.s32 %v215, %v247
    %v256 = vadd.s32 %v216, %v248
    %v257 = vadd.s32 %v217, %v249
    %v258 = vadd.s32 %v218, %v250
    %v259 = vadd.s32 %v219, %v251
    %v260 = vadd.s32 %v220, %v252
    %v261 = vadd.s32 %v221, %v253
    %v262 = vadd.s32 %v222, %v254
    %263 = vset.pattern.permute.xlu0 6
    %264 = vperm.xlu0 %263, %v23
    %v265 = vpop.permute.xlu0 %264
    %267 = vset.pattern.permute.xlu0 6
    %268 = vperm.xlu0 %267, %v24
    %v269 = vpop.permute.xlu0 %268
    %271 = vset.pattern.permute.xlu0 6
    %272 = vperm.xlu0 %271, %v25
    %v273 = vpop.permute.xlu0 %272
    %275 = vset.pattern.permute.xlu0 6
    %276 = vperm.xlu0 %275, %v26
    %v277 = vpop.permute.xlu0 %276
    %vm279 = vcmp.gt.f32.partialorder %v15, %v265
    %vm280 = vcmp.gt.f32.partialorder %v16, %v265
    %vm281 = vcmp.gt.f32.partialorder %v17, %v269
    %vm282 = vcmp.gt.f32.partialorder %v18, %v269
    %vm283 = vcmp.gt.f32.partialorder %v19, %v273
    %vm284 = vcmp.gt.f32.partialorder %v20, %v273
    %vm285 = vcmp.gt.f32.partialorder %v21, %v277
    %vm286 = vcmp.gt.f32.partialorder %v22, %v277
    %v287 = vsel %vm279, 1, 0
    %v288 = vsel %vm280, 1, 0
    %v289 = vsel %vm281, 1, 0
    %v290 = vsel %vm282, 1, 0
    %v291 = vsel %vm283, 1, 0
    %v292 = vsel %vm284, 1, 0
    %v293 = vsel %vm285, 1, 0
    %v294 = vsel %vm286, 1, 0
    %v295 = vadd.s32 %v255, %v287
    %v296 = vadd.s32 %v256, %v288
    %v297 = vadd.s32 %v257, %v289
    %v298 = vadd.s32 %v258, %v290
    %v299 = vadd.s32 %v259, %v291
    %v300 = vadd.s32 %v260, %v292
    %v301 = vadd.s32 %v261, %v293
    %v302 = vadd.s32 %v262, %v294
    %v303 = vld [vmem:[%s2] sm:$0xff]
    %v304 = vld [vmem:[%s2 + $0x8] sm:$0xff]
    %v305 = vld [vmem:[%s2 + $0x10] sm:$0xff]
    %v306 = vld [vmem:[%s2 + $0x18] sm:$0xff]
    %v307 = vmul.u32 %v295, 4
    %v308 = vmul.u32 %v296, 4
    %v309 = vmul.u32 %v297, 4
    %v310 = vmul.u32 %v298, 4
    %v311 = vmul.u32 %v299, 4
    %v312 = vmul.u32 %v300, 4
    %v313 = vmul.u32 %v301, 4
    %v314 = vmul.u32 %v302, 4
    %315 = vset.pattern.permute.xlu0 0
    %316 = vperm.xlu0 %315, %v303
    %v317 = vpop.permute.xlu0 %316
    %318 = vset.pattern.permute.xlu0 0
    %319 = vperm.xlu0 %318, %v304
    %v320 = vpop.permute.xlu0 %319
    %321 = vset.pattern.permute.xlu0 0
    %322 = vperm.xlu0 %321, %v305
    %v323 = vpop.permute.xlu0 %322
    %324 = vset.pattern.permute.xlu0 0
    %325 = vperm.xlu0 %324, %v306
    %v326 = vpop.permute.xlu0 %325
    %v327 = vshra.s32 %v317, %v307
    %v328 = vshra.s32 %v317, %v308
    %v329 = vshra.s32 %v320, %v309
    %v330 = vshra.s32 %v320, %v310
    %v331 = vshra.s32 %v323, %v311
    %v332 = vshra.s32 %v323, %v312
    %v333 = vshra.s32 %v326, %v313
    %v334 = vshra.s32 %v326, %v314
    %v335 = vand.u32 %v327, 15
    %v336 = vand.u32 %v328, 15
    %v337 = vand.u32 %v329, 15
    %v338 = vand.u32 %v330, 15
    %v339 = vand.u32 %v331, 15
    %v340 = vand.u32 %v332, 15
    %v341 = vand.u32 %v333, 15
    %v342 = vand.u32 %v334, 15
    %v343 = vpack.c.b16 %v337, %v335
    %v344 = vpack.c.b16 %v341, %v339
    %v345 = vpack.c.b8 %v344, %v343
    %v346 = vpack.c.b16 %v338, %v336
    %v347 = vpack.c.b16 %v342, %v340
    %v348 = vpack.c.b8 %v347, %v346
    %349 = vst [vmem:[#allocation2] sm:$0xff] %v345
    %350 = vst [vmem:[#allocation2 + $0x8] sm:$0xff] %v348
    // Predicated region
    $region14: #{tpu_custom_call.1} parent=1 // pred_check
      _
    $region15: #{tpu_custom_call.1} parent=1 // pred_check_branch
      %352 = sbr.rel (0) target = $region17
    $region16: #{tpu_custom_call.1} parent=1 // pred_region
      %s354 = ssub.s32 256, 256
      %355 = vsyncadd [#allocation3], %s354
      %s357 = sshll.u32 [#allocation2], 4
      %s358 = int_to_ptr.vmem [resolvable:$true] %s357
      %360 = dma.vmem_to_hbm [thread:$0]  %s358, 256, %s3, [#allocation3]
    $region17: #{tpu_custom_call.1} parent=1 // pred_fallthru
      _
    // Predicated region
    $region18: #{tpu_custom_call.1} parent=1 // pred_check
      _
    $region19: #{tpu_custom_call.1} parent=1 // pred_check_branch
      %362 = sbr.rel (0) target = $region21
    $region20: #{tpu_custom_call.1} parent=1 // pred_region
      %363 = dma.done [#allocation3], 256
    $region21: #{tpu_custom_call.1} parent=1 // pred_fallthru
      _
    %364 = vsyncpa [#allocation3], 1

</llo_original>
